<compile_context>
chip_gen: v7x
topology: tpu7x:2x2x1
jax: 0.10.0
libtpu: 0.0.40
codegen_flags: <defaults>
</compile_context>

<pallas_src>
import functools

import jax
import jax.numpy as jnp
from jax.experimental import pallas as pl
from jax.experimental.pallas import tpu as pltpu


# ------------------------------ fused kernel --------------------------------

def _fused_loss_kernel(x_ref, wt_ref, alpha_ref, out_ref, *,
                       n_batch, n_ch, n_out, hw):
    # x_ref:     (N*C, H*W) f32 in VMEM  (NCHW flattened, lane-dense)
    # wt_ref:    (K, C)     f32 in VMEM  (constraint weight, pre-transposed)
    # alpha_ref: (1,)       f32 in SMEM
    # out_ref:   (3,)       f32 in SMEM  -> [loss, td, ud]
    x = x_ref[...]

    # TODO(synk): Augmenter.forward is abstract in the PyTorch source; this
    # deterministic elementwise transform stands in for it.
    t = jnp.tanh(x) * 0.9 + 0.05

    # Delta computed once; its vregs feed both reductions (x and t read once).
    d = t - x                                           # (N*C, HW)
    ud = jnp.sum(d * d) * (1.0 / (n_batch * n_ch * hw))  # mean((x-t)^2)

    # Constraint is a 1x1 conv over channels; by linearity ct - co = (t-x) @ W.
    # C=4 -> K=8 contraction as VPU broadcast-MACs over full (K, HW) = (8, 256)
    # tiles; keeps the MXU out of the picture at these tiny channel counts.
    wt = wt_ref[...]                                    # (K, C)
    td_sum = jnp.float32(0.0)
    for n in range(n_batch):
        base = n * n_ch
        acc = wt[:, 0:1] * d[base:base + 1, :]          # (K,1)*(1,HW) -> (K,HW)
        for c in range(1, n_ch):
            acc = acc + wt[:, c:c + 1] * d[base + c:base + c + 1, :]
        td_sum = td_sum + jnp.sum(acc * acc)
    td = td_sum * (1.0 / (n_batch * n_out * hw))        # mean((ct-co)^2)

    alpha = alpha_ref[0]
    out_ref[0] = td - alpha * ud
    out_ref[1] = td
    out_ref[2] = ud


# -------------------------------- wrapper ------------------------------------

def loss_function(x, w_constraint, alpha=1.0):
    """Pallas equivalent of Augmenter.loss_function (single fused kernel)."""
    n, c, h, w = x.shape
    hw = h * w
    k_out = w_constraint.shape[1]
    assert hw % 128 == 0, "H*W must be a multiple of 128 (lane-dense layout)"

    x2d = x.reshape(n * c, hw)                 # NCHW kept; lane-dense slab
    w_t = jnp.transpose(w_constraint)          # (K, C): avoids in-kernel transpose
    alpha_arr = jnp.full((1,), alpha, dtype=jnp.float32)

    out = pl.pallas_call(
        functools.partial(_fused_loss_kernel,
                          n_batch=n, n_ch=c, n_out=k_out, hw=hw),
        out_shape=jax.ShapeDtypeStruct((3,), jnp.float32),
        in_specs=[pl.BlockSpec(memory_space=pltpu.MemorySpace.VMEM),
                  pl.BlockSpec(memory_space=pltpu.MemorySpace.VMEM),
                  pl.BlockSpec(memory_space=pltpu.MemorySpace.SMEM)],
        out_specs=pl.BlockSpec(memory_space=pltpu.MemorySpace.SMEM),
    )(x2d, w_t, alpha_arr)

    return {"loss": out[0],
            "TransformedDelta": out[1],
            "UntransformedDelta": out[2]}


# ------------------------------- reference -----------------------------------

def loss_function_ref(x, w_constraint, alpha=1.0):
    n, c, h, w = x.shape
    t = jnp.tanh(x) * 0.9 + 0.05

    def apply_constraint(v):
        v2d = jnp.transpose(v, (0, 2, 3, 1)).reshape(n * h * w, c)
        return v2d @ w_constraint

    co = apply_constraint(x)
    ct = apply_constraint(t)
    td = jnp.mean((ct - co) ** 2)
    ud = jnp.mean((x - t) ** 2)
    return td - ud * alpha, td, ud


# --------------------------------- main --------------------------------------

if __name__ == "__main__":
    key = jax.random.PRNGKey(0)
    N, C, H, W = 2, 4, 16, 16
    K_OUT = 8  # constraint output channels

    x = jax.random.normal(key, (N, C, H, W), dtype=jnp.float32)
    # deterministic constraint weights (synthetic, not a checkpoint)
    w_constraint = (jnp.arange(C * K_OUT, dtype=jnp.float32)
                    .reshape(C, K_OUT) / (C * K_OUT) - 0.5)

    out = loss_function(x, w_constraint, alpha=1.0)
    jax.block_until_ready(out["loss"])

    ref_loss, ref_td, ref_ud = loss_function_ref(x, w_constraint, alpha=1.0)
    assert jnp.allclose(out["loss"], ref_loss, atol=1e-5, rtol=1e-5)
    assert jnp.allclose(out["TransformedDelta"], ref_td, atol=1e-5, rtol=1e-5)
    assert jnp.allclose(out["UntransformedDelta"], ref_ud, atol=1e-5, rtol=1e-5)

    print("KERNEL_OK")
</pallas_src>

<mosaic_0001>
module attributes {stable_mosaic.version = 11 : i64} {
  func.func @_fused_loss_kernel(%arg0: memref<8x256xf32, #tpu.memory_space<vmem>>, %arg1: memref<8x4xf32, #tpu.memory_space<vmem>>, %arg2: memref<1xf32, #tpu.memory_space<smem>>, %arg3: memref<3xf32, #tpu.memory_space<smem>>) attributes {dimension_semantics = [], scalar_prefetch = 0 : i64, scratch_operands = 0 : i64, tpu.core_type = #tpu.core_type<tc>} {
    %c0 = arith.constant 0 : index
    %c0_0 = arith.constant 0 : index
    %0 = vector.load %arg0[%c0, %c0_0] : memref<8x256xf32, #tpu.memory_space<vmem>>, vector<8x256xf32>
    %1 = math.tanh %0 : vector<8x256xf32>
    %cst = arith.constant 0.899999976 : f32
    %2 = vector.broadcast %cst : f32 to vector<8x256xf32>
    %3 = arith.mulf %1, %2 : vector<8x256xf32>
    %cst_1 = arith.constant 5.000000e-02 : f32
    %4 = vector.broadcast %cst_1 : f32 to vector<8x256xf32>
    %5 = arith.addf %3, %4 : vector<8x256xf32>
    %6 = arith.subf %5, %0 : vector<8x256xf32>
    %7 = arith.mulf %6, %6 : vector<8x256xf32>
    %8 = vector.shape_cast %7 : vector<8x256xf32> to vector<1x8x256xf32>
    %cst_2 = arith.constant dense<0.000000e+00> : vector<1xf32>
    %9 = vector.multi_reduction <add>, %8, %cst_2 [1, 2] : vector<1x8x256xf32> to vector<1xf32>
    %10 = vector.shape_cast %9 : vector<1xf32> to vector<1x1x1xf32>
    %11 = vector.extract %10[0, 0, 0] : f32 from vector<1x1x1xf32>
    %cst_3 = arith.constant 4.8828125E-4 : f32
    %12 = arith.mulf %11, %cst_3 : f32
    %c0_4 = arith.constant 0 : index
    %c0_5 = arith.constant 0 : index
    %13 = vector.load %arg1[%c0_4, %c0_5] : memref<8x4xf32, #tpu.memory_space<vmem>>, vector<8x4xf32>
    %14 = vector.extract_strided_slice %13 {offsets = [0, 0], sizes = [8, 1], strides = [1, 1]} : vector<8x4xf32> to vector<8x1xf32>
    %15 = vector.extract_strided_slice %6 {offsets = [0, 0], sizes = [1, 256], strides = [1, 1]} : vector<8x256xf32> to vector<1x256xf32>
    %16 = vector.broadcast %14 : vector<8x1xf32> to vector<8x256xf32>
    %17 = vector.broadcast %15 : vector<1x256xf32> to vector<8x256xf32>
    %18 = arith.mulf %16, %17 : vector<8x256xf32>
    %19 = vector.extract_strided_slice %13 {offsets = [0, 1], sizes = [8, 1], strides = [1, 1]} : vector<8x4xf32> to vector<8x1xf32>
    %20 = vector.extract_strided_slice %6 {offsets = [1, 0], sizes = [1, 256], strides = [1, 1]} : vector<8x256xf32> to vector<1x256xf32>
    %21 = vector.broadcast %19 : vector<8x1xf32> to vector<8x256xf32>
    %22 = vector.broadcast %20 : vector<1x256xf32> to vector<8x256xf32>
    %23 = arith.mulf %21, %22 : vector<8x256xf32>
    %24 = arith.addf %18, %23 : vector<8x256xf32>
    %25 = vector.extract_strided_slice %13 {offsets = [0, 2], sizes = [8, 1], strides = [1, 1]} : vector<8x4xf32> to vector<8x1xf32>
    %26 = vector.extract_strided_slice %6 {offsets = [2, 0], sizes = [1, 256], strides = [1, 1]} : vector<8x256xf32> to vector<1x256xf32>
    %27 = vector.broadcast %25 : vector<8x1xf32> to vector<8x256xf32>
    %28 = vector.broadcast %26 : vector<1x256xf32> to vector<8x256xf32>
    %29 = arith.mulf %27, %28 : vector<8x256xf32>
    %30 = arith.addf %24, %29 : vector<8x256xf32>
    %31 = vector.extract_strided_slice %13 {offsets = [0, 3], sizes = [8, 1], strides = [1, 1]} : vector<8x4xf32> to vector<8x1xf32>
    %32 = vector.extract_strided_slice %6 {offsets = [3, 0], sizes = [1, 256], strides = [1, 1]} : vector<8x256xf32> to vector<1x256xf32>
    %33 = vector.broadcast %31 : vector<8x1xf32> to vector<8x256xf32>
    %34 = vector.broadcast %32 : vector<1x256xf32> to vector<8x256xf32>
    %35 = arith.mulf %33, %34 : vector<8x256xf32>
    %36 = arith.addf %30, %35 : vector<8x256xf32>
    %37 = arith.mulf %36, %36 : vector<8x256xf32>
    %38 = vector.shape_cast %37 : vector<8x256xf32> to vector<1x8x256xf32>
    %cst_6 = arith.constant dense<0.000000e+00> : vector<1xf32>
    %39 = vector.multi_reduction <add>, %38, %cst_6 [1, 2] : vector<1x8x256xf32> to vector<1xf32>
    %40 = vector.shape_cast %39 : vector<1xf32> to vector<1x1x1xf32>
    %41 = vector.extract %40[0, 0, 0] : f32 from vector<1x1x1xf32>
    %cst_7 = arith.constant 0.000000e+00 : f32
    %42 = arith.addf %cst_7, %41 : f32
    %43 = vector.extract_strided_slice %13 {offsets = [0, 0], sizes = [8, 1], strides = [1, 1]} : vector<8x4xf32> to vector<8x1xf32>
    %44 = vector.extract_strided_slice %6 {offsets = [4, 0], sizes = [1, 256], strides = [1, 1]} : vector<8x256xf32> to vector<1x256xf32>
    %45 = vector.broadcast %43 : vector<8x1xf32> to vector<8x256xf32>
    %46 = vector.broadcast %44 : vector<1x256xf32> to vector<8x256xf32>
    %47 = arith.mulf %45, %46 : vector<8x256xf32>
    %48 = vector.extract_strided_slice %13 {offsets = [0, 1], sizes = [8, 1], strides = [1, 1]} : vector<8x4xf32> to vector<8x1xf32>
    %49 = vector.extract_strided_slice %6 {offsets = [5, 0], sizes = [1, 256], strides = [1, 1]} : vector<8x256xf32> to vector<1x256xf32>
    %50 = vector.broadcast %48 : vector<8x1xf32> to vector<8x256xf32>
    %51 = vector.broadcast %49 : vector<1x256xf32> to vector<8x256xf32>
    %52 = arith.mulf %50, %51 : vector<8x256xf32>
    %53 = arith.addf %47, %52 : vector<8x256xf32>
    %54 = vector.extract_strided_slice %13 {offsets = [0, 2], sizes = [8, 1], strides = [1, 1]} : vector<8x4xf32> to vector<8x1xf32>
    %55 = vector.extract_strided_slice %6 {offsets = [6, 0], sizes = [1, 256], strides = [1, 1]} : vector<8x256xf32> to vector<1x256xf32>
    %56 = vector.broadcast %54 : vector<8x1xf32> to vector<8x256xf32>
    %57 = vector.broadcast %55 : vector<1x256xf32> to vector<8x256xf32>
    %58 = arith.mulf %56, %57 : vector<8x256xf32>
    %59 = arith.addf %53, %58 : vector<8x256xf32>
    %60 = vector.extract_strided_slice %13 {offsets = [0, 3], sizes = [8, 1], strides = [1, 1]} : vector<8x4xf32> to vector<8x1xf32>
    %61 = vector.extract_strided_slice %6 {offsets = [7, 0], sizes = [1, 256], strides = [1, 1]} : vector<8x256xf32> to vector<1x256xf32>
    %62 = vector.broadcast %60 : vector<8x1xf32> to vector<8x256xf32>
    %63 = vector.broadcast %61 : vector<1x256xf32> to vector<8x256xf32>
    %64 = arith.mulf %62, %63 : vector<8x256xf32>
    %65 = arith.addf %59, %64 : vector<8x256xf32>
    %66 = arith.mulf %65, %65 : vector<8x256xf32>
    %67 = vector.shape_cast %66 : vector<8x256xf32> to vector<1x8x256xf32>
    %cst_8 = arith.constant dense<0.000000e+00> : vector<1xf32>
    %68 = vector.multi_reduction <add>, %67, %cst_8 [1, 2] : vector<1x8x256xf32> to vector<1xf32>
    %69 = vector.shape_cast %68 : vector<1xf32> to vector<1x1x1xf32>
    %70 = vector.extract %69[0, 0, 0] : f32 from vector<1x1x1xf32>
    %71 = arith.addf %42, %70 : f32
    %cst_9 = arith.constant 2.44140625E-4 : f32
    %72 = arith.mulf %71, %cst_9 : f32
    %c0_10 = arith.constant 0 : index
    %73 = memref.load %arg2[%c0_10] : memref<1xf32, #tpu.memory_space<smem>>
    %74 = arith.mulf %73, %12 : f32
    %75 = arith.subf %72, %74 : f32
    %c0_11 = arith.constant 0 : index
    %76 = memref.load %arg3[%c0_11] : memref<3xf32, #tpu.memory_space<smem>>
    memref.store %75, %arg3[%c0_11] : memref<3xf32, #tpu.memory_space<smem>>
    %c1 = arith.constant 1 : index
    %77 = memref.load %arg3[%c1] : memref<3xf32, #tpu.memory_space<smem>>
    memref.store %72, %arg3[%c1] : memref<3xf32, #tpu.memory_space<smem>>
    %c2 = arith.constant 2 : index
    %78 = memref.load %arg3[%c2] : memref<3xf32, #tpu.memory_space<smem>>
    memref.store %12, %arg3[%c2] : memref<3xf32, #tpu.memory_space<smem>>
    return
  }
}

</mosaic_0001>

<llo_original>
// kernel: tpu_custom_call.1
$region0: #{tpu_custom_call.1}
  #allocation0 [shape = 'u32[]', space=smem, size = 0x4, offset = 0x4, fixed_abs, tag = 'smem constant byte address 0x4 - core index']
  #allocation1 [shape = 'u32[144,128]{1,0:T(1,128)}', space=vmem, size = 0x12000, scoped, tag = 'internal scratch']
  #allocation2 [shape = 'f32[1]{0:T(128)S(6)}', space=smem, size = 0x200, scoped, tag = 'scoped memory for tpu_custom_call.1']
  %s0 = inlined_call_operand.hbm [shape: f32[8,256], index: 0, kind: input, shape index: {}]
  %s1 = inlined_call_operand.vmem [shape: f32[8,4], index: 1, kind: input, shape index: {}]
  %s2 = inlined_call_operand.<no memory space> [shape: f32[1], index: 2, kind: input, shape index: {}]
  %s3 = inlined_call_operand.hbm [shape: f32[3], index: 3, kind: output, shape index: {}]
  %s4 = sld [smem:[#allocation0]]
  $region26: #{tpu_custom_call.1} parent=0
    _
  %s6 = ssub.s32 1, %s4
  %s7 = scalar_select 0, %s6, %s4
  %8 = sst [smem:[#allocation2]] %s2
  $region1: #{tpu_custom_call.1} parent=0
    #allocation3 [shape = 'u8[8192]{0}', space=vmem, size = 0x2000, scoped, tag = 'input window, operand 0, single buffered']
    #allocation4 [shape = 's32[1]{0}', space=sflag, size = 0x4, scoped, tag = 'scoped memory for tpu_custom_call.1']
    #allocation5 [shape = 's32[1]{0}', space=sflag, size = 0x4, scoped, tag = 'scoped memory for tpu_custom_call.1']
    #allocation6 [shape = 'u8[512]{0}', space=smem, size = 0x200, scoped, tag = 'output window, operand 0, single buffered']
    %9 = vsyncpa [#allocation4], 0
    %10 = vsyncpa [#allocation5], 0
    // Predicated region
    $region2: #{tpu_custom_call.1} parent=1 // pred_check
      _
    $region3: #{tpu_custom_call.1} parent=1 // pred_check_branch
      %12 = sbr.rel (0) target = $region5
    $region4: #{tpu_custom_call.1} parent=1 // pred_region
      %s14 = ssub.s32 256, 256
      %15 = vsyncadd [#allocation4], %s14
      %s17 = sshll.u32 [#allocation3], 4
      %s18 = int_to_ptr.vmem [resolvable:$true] %s17
      %20 = dma.hbm_to_vmem [thread:$0]  %s0, 256, %s18, [#allocation4]
    $region5: #{tpu_custom_call.1} parent=1 // pred_fallthru
      _
    // Predicated region
    $region6: #{tpu_custom_call.1} parent=1 // pred_check
      _
    $region7: #{tpu_custom_call.1} parent=1 // pred_check_branch
      %22 = sbr.rel (0) target = $region9
    $region8: #{tpu_custom_call.1} parent=1 // pred_region
      _
    $region9: #{tpu_custom_call.1} parent=1 // pred_fallthru
      _
    // Predicated region
    $region10: #{tpu_custom_call.1} parent=1 // pred_check
      _
    $region11: #{tpu_custom_call.1} parent=1 // pred_check_branch
      %24 = sbr.rel (0) target = $region13
    $region12: #{tpu_custom_call.1} parent=1 // pred_region
      _
    $region13: #{tpu_custom_call.1} parent=1 // pred_fallthru
      _
    // Predicated region
    $region14: #{tpu_custom_call.1} parent=1 // pred_check
      _
    $region15: #{tpu_custom_call.1} parent=1 // pred_check_branch
      %26 = sbr.rel (0) target = $region17
    $region16: #{tpu_custom_call.1} parent=1 // pred_region
      %27 = dma.done [#allocation4], 256
    $region17: #{tpu_custom_call.1} parent=1 // pred_fallthru
      _
    %v28 = vld [vmem:[#allocation3] sm:$0xff]
    %v29 = vld [vmem:[#allocation3 + $0x8] sm:$0xff]
    %v30 = vtanh.pop %v28
    %v31 = vtanh.pop %v29
    %v32 = vmul.f32 %v30, 0.9
    %v33 = vmul.f32 %v31, 0.9
    %v34 = vadd.f32 %v32, 0.05
    %v35 = vadd.f32 %v33, 0.05
    %v36 = vsub.f32 %v34, %v28
    %v37 = vsub.f32 %v35, %v29
    %v38 = vmul.f32 %v36, %v36
    %v39 = vmul.f32 %v37, %v37
    %v40 = vadd.f32 %v38, %v39
    %41 = vadd.xlane.f32.xlu0 %v40
    %v42 = vpop.xlane.xlu0 %41
    %v43 = vrot.slane %v42, 4
    %v44 = vadd.f32 %v42, %v43
    %v45 = vrot.slane %v44, 2
    %v46 = vadd.f32 %v44, %v45
    %v47 = vrot.slane %v46, 1
    %v48 = vadd.f32 %v46, %v47
    %s49 = vtos %v48
    %s50 = smul.f32 %s49, 0.00048828125
    %v51 = vld [vmem:[%s1] sm:$0xff]
    %53 = vset.pattern.permute.xlu0 0
    %54 = vperm.xlu0 %53, %v51
    %v55 = vpop.permute.xlu0 %54
    %v57 = vlaneseq
    %v58 = vshrl.u32 %v57, 7
    %v59 = vsub.s32 0, %v58
    %v60 = vrot.slane %v36, %v59
    %v61 = vlaneseq
    %v62 = vshrl.u32 %v61, 7
    %v63 = vsub.s32 0, %v62
    %v64 = vrot.slane %v37, %v63
    %v65 = vmul.f32 %v55, %v60
    %v66 = vmul.f32 %v55, %v64
    %67 = vset.pattern.permute.xlu0 1
    %68 = vperm.xlu0 %67, %v51
    %v69 = vpop.permute.xlu0 %68
    %v71 = vlaneseq
    %v72 = vshrl.u32 %v71, 7
    %v73 = vsub.s32 1, %v72
    %v74 = vrot.slane %v36, %v73
    %v75 = vlaneseq
    %v76 = vshrl.u32 %v75, 7
    %v77 = vsub.s32 1, %v76
    %v78 = vrot.slane %v37, %v77
    %v79 = vmul.f32 %v69, %v74
    %v80 = vmul.f32 %v69, %v78
    %v81 = vadd.f32 %v65, %v79
    %v82 = vadd.f32 %v66, %v80
    %83 = vset.pattern.permute.xlu0 2
    %84 = vperm.xlu0 %83, %v51
    %v85 = vpop.permute.xlu0 %84
    %v87 = vlaneseq
    %v88 = vshrl.u32 %v87, 7
    %v89 = vsub.s32 2, %v88
    %v90 = vrot.slane %v36, %v89
    %v91 = vlaneseq
    %v92 = vshrl.u32 %v91, 7
    %v93 = vsub.s32 2, %v92
    %v94 = vrot.slane %v37, %v93
    %v95 = vmul.f32 %v85, %v90
    %v96 = vmul.f32 %v85, %v94
    %v97 = vadd.f32 %v81, %v95
    %v98 = vadd.f32 %v82, %v96
    %99 = vset.pattern.permute.xlu0 3
    %100 = vperm.xlu0 %99, %v51
    %v101 = vpop.permute.xlu0 %100
    %v103 = vlaneseq
    %v104 = vshrl.u32 %v103, 7
    %v105 = vsub.s32 3, %v104
    %v106 = vrot.slane %v36, %v105
    %v107 = vlaneseq
    %v108 = vshrl.u32 %v107, 7
    %v109 = vsub.s32 3, %v108
    %v110 = vrot.slane %v37, %v109
    %v111 = vmul.f32 %v101, %v106
    %v112 = vmul.f32 %v101, %v110
    %v113 = vadd.f32 %v97, %v111
    %v114 = vadd.f32 %v98, %v112
    %v115 = vmul.f32 %v113, %v113
    %v116 = vmul.f32 %v114, %v114
    %v117 = vadd.f32 %v115, %v116
    %118 = vadd.xlane.f32.xlu0 %v117
    %v119 = vpop.xlane.xlu0 %118
    %v120 = vrot.slane %v119, 4
    %v121 = vadd.f32 %v119, %v120
    %v122 = vrot.slane %v121, 2
    %v123 = vadd.f32 %v121, %v122
    %v124 = vrot.slane %v123, 1
    %v125 = vadd.f32 %v123, %v124
    %s126 = vtos %v125
    %s127 = sadd.f32 %s126, 0.0
    %v128 = vlaneseq
    %v129 = vshrl.u32 %v128, 7
    %v130 = vsub.s32 4, %v129
    %v131 = vrot.slane %v36, %v130
    %v132 = vlaneseq
    %v133 = vshrl.u32 %v132, 7
    %v134 = vsub.s32 4, %v133
    %v135 = vrot.slane %v37, %v134
    %v136 = vmul.f32 %v55, %v131
    %v137 = vmul.f32 %v55, %v135
    %v138 = vlaneseq
    %v139 = vshrl.u32 %v138, 7
    %v140 = vsub.s32 5, %v139
    %v141 = vrot.slane %v36, %v140
    %v142 = vlaneseq
    %v143 = vshrl.u32 %v142, 7
    %v144 = vsub.s32 5, %v143
    %v145 = vrot.slane %v37, %v144
    %v146 = vmul.f32 %v69, %v141
    %v147 = vmul.f32 %v69, %v145
    %v148 = vadd.f32 %v136, %v146
    %v149 = vadd.f32 %v137, %v147
    %v150 = vlaneseq
    %v151 = vshrl.u32 %v150, 7
    %v152 = vsub.s32 6, %v151
    %v153 = vrot.slane %v36, %v152
    %v154 = vlaneseq
    %v155 = vshrl.u32 %v154, 7
    %v156 = vsub.s32 6, %v155
    %v157 = vrot.slane %v37, %v156
    %v158 = vmul.f32 %v85, %v153
    %v159 = vmul.f32 %v85, %v157
    %v160 = vadd.f32 %v148, %v158
    %v161 = vadd.f32 %v149, %v159
    %v162 = vlaneseq
    %v163 = vshrl.u32 %v162, 7
    %v164 = vsub.s32 7, %v163
    %v165 = vrot.slane %v36, %v164
    %v166 = vlaneseq
    %v167 = vshrl.u32 %v166, 7
    %v168 = vsub.s32 7, %v167
    %v169 = vrot.slane %v37, %v168
    %v170 = vmul.f32 %v101, %v165
    %v171 = vmul.f32 %v101, %v169
    %v172 = vadd.f32 %v160, %v170
    %v173 = vadd.f32 %v161, %v171
    %v174 = vmul.f32 %v172, %v172
    %v175 = vmul.f32 %v173, %v173
    %v176 = vadd.f32 %v174, %v175
    %177 = vadd.xlane.f32.xlu0 %v176
    %v178 = vpop.xlane.xlu0 %177
    %v179 = vrot.slane %v178, 4
    %v180 = vadd.f32 %v178, %v179
    %v181 = vrot.slane %v180, 2
    %v182 = vadd.f32 %v180, %v181
    %v183 = vrot.slane %v182, 1
    %v184 = vadd.f32 %v182, %v183
    %s185 = vtos %v184
    %s186 = sadd.f32 %s127, %s185
    %s187 = smul.f32 %s186, 0.00024414063
    %s188 = sld [smem:[#allocation2]]
    %s189 = smul.f32 %s188, %s50
    %s190 = ssub.f32 %s187, %s189
    %s191 = scalar_lea.smem [#allocation6], 0
    %192 = sst [smem:[%s191]] %s190
    %s193 = scalar_lea.smem [#allocation6], 1
    %194 = sst [smem:[%s193]] %s187
    %s195 = scalar_lea.smem [#allocation6], 2
    %196 = sst [smem:[%s195]] %s50
    // Predicated region
    $region18: #{tpu_custom_call.1} parent=1 // pred_check
      _
    $region19: #{tpu_custom_call.1} parent=1 // pred_check_branch
      %198 = sbr.rel (0) target = $region21
    $region20: #{tpu_custom_call.1} parent=1 // pred_region
      %s200 = ssub.s32 16, 16
      %201 = vsyncadd [#allocation5], %s200
      %204 = dma.smem_to_hbm [#allocation6], 16, %s3, [#allocation5]
    $region21: #{tpu_custom_call.1} parent=1 // pred_fallthru
      _
    // Predicated region
    $region22: #{tpu_custom_call.1} parent=1 // pred_check
      _
    $region23: #{tpu_custom_call.1} parent=1 // pred_check_branch
      %206 = sbr.rel (0) target = $region25
    $region24: #{tpu_custom_call.1} parent=1 // pred_region
      %207 = dma.done [#allocation5], 16
    $region25: #{tpu_custom_call.1} parent=1 // pred_fallthru
      _
    %208 = sfence
    %209 = vsyncpa [#allocation4], 1
    %210 = vsyncpa [#allocation5], 1

</llo_original>
